<compile_context>
chip_gen: v7x
topology: tpu7x:2x2x1
jax: 0.10.0
libtpu: 0.0.40
codegen_flags: <defaults>
</compile_context>

<pallas_src>
import jax
import jax.numpy as jnp
from jax import lax
from jax.experimental import pallas as pl
from jax.experimental.pallas import tpu as pltpu


_VMEM_LIMIT_BYTES = 48 * 1024 * 1024    # scoped-VMEM request; safe on v5e/v6e/v7x
_TILE_BUDGET_BYTES = 12 * 1024 * 1024   # per input buffer (Pallas double-buffers it)
_MXU_REDUCE_MAX_LANES = 256             # use MXU for lane reductions when L is small


def _make_hoyer_tile_kernel(use_mxu_reduce: bool):
    """Kernel: per-tile partial sum of per-row Hoyer ratios ||s||_1 / ||s||_2."""

    def kernel(s_ref, r_ref):
        s = s_ref[...].astype(jnp.float32)          # (tile_rows, L)
        s_abs = jnp.abs(s)
        s_sq = s * s
        if use_mxu_reduce:
            # Lane reduction on the (otherwise idle) MXU: keeps the XLU free
            # when the HBM step time is tiny (v7x).
            ones = jnp.ones((s.shape[-1], 1), jnp.float32)
            l1 = jnp.dot(s_abs, ones, preferred_element_type=jnp.float32)
            l2sq = jnp.dot(s_sq, ones, preferred_element_type=jnp.float32)
        else:
            l1 = jnp.sum(s_abs, axis=-1, keepdims=True)     # (tile_rows, 1)
            l2sq = jnp.sum(s_sq, axis=-1, keepdims=True)    # (tile_rows, 1)
        # rsqrt fuses sqrt + reciprocal into a single exact EUP op.  Guard
        # all-zero (padding) rows so they contribute exactly 0.
        # NOTE: a genuinely all-zero S vector also yields 0 here (PyTorch would
        # produce NaN for that degenerate case).
        ratio = jnp.where(l2sq > 0.0, l1 * lax.rsqrt(l2sq), 0.0)
        # Collapse to a single per-tile scalar -> one (1,1) store per step.
        r_ref[...] = jnp.sum(ratio, axis=0, keepdims=True)

    return kernel


def _pick_tile_rows(n_rows, lane_len, vmem_budget_bytes=_TILE_BUDGET_BYTES):
    """Tile row count: multiple of 8, <= VMEM budget, >=2 tiles when possible."""
    max_rows = max(8, (vmem_budget_bytes // (lane_len * 4)) // 8 * 8)
    t = min(n_rows, max_rows)
    t = max(8, t - (t % 8))
    if n_rows >= 16:
        # Cap so the grid has at least 2 tiles -> both v7x TensorCores get work.
        half = ((n_rows // 2) + 7) // 8 * 8
        t = min(t, max(8, half))
    return t


def hoyer_loss(s_packed: jax.Array, n_layers: int, factor: float = 1.0) -> jax.Array:
    """Computes factor / n_layers * sum_i ||S_i||_1 / ||S_i||_2.

    s_packed: (n_rows, L) f32; each real row is an S vector zero-padded on the
      right; rows beyond n_layers are all-zero padding. n_rows % 8 == 0,
      L % 128 == 0.
    Returns a scalar f32.
    """
    n_rows, L = s_packed.shape
    assert n_rows % 8 == 0 and L % 128 == 0, "pack rows to x8, lanes to x128"
    # TODO(synk): for extremely long S vectors (single 8-row tile exceeding the
    # VMEM limit) add a lane-tiled "arbitrary" grid axis with l1/l2 accumulators.
    assert 2 * 8 * L * 4 <= _VMEM_LIMIT_BYTES, "S vector too long for single-axis tiling"

    tile_rows = _pick_tile_rows(n_rows, L)
    num_tiles = -(-n_rows // tile_rows)
    padded_rows = num_tiles * tile_rows
    if padded_rows != n_rows:
        # Zero rows contribute exactly 0 to the partial sums.
        s_packed = jnp.pad(s_packed, ((0, padded_rows - n_rows), (0, 0)))

    kernel = _make_hoyer_tile_kernel(use_mxu_reduce=(L <= _MXU_REDUCE_MAX_LANES))

    partials = pl.pallas_call(
        kernel,
        out_shape=jax.ShapeDtypeStruct((num_tiles, 1), jnp.float32),
        grid_spec=pltpu.PrefetchScalarGridSpec(
            num_scalar_prefetch=0,
            grid=(num_tiles,),
            in_specs=[pl.BlockSpec((tile_rows, L), lambda i: (i, 0))],
            out_specs=pl.BlockSpec((1, 1), lambda i: (i, 0)),
        ),
        compiler_params=pltpu.CompilerParams(
            dimension_semantics=("parallel",),
            vmem_limit_bytes=_VMEM_LIMIT_BYTES,
        ),
    )(s_packed)

    # num_tiles scalars -> tiny reduce + scale in plain JAX.
    return (jnp.sum(partials) * (float(factor) / float(n_layers))).astype(jnp.float32)


def pack_s_vectors(s_list, row_multiple=8, lane_multiple=128):
    """Pack 1-D S vectors into a (rows x8, lanes x128) zero-padded f32 matrix."""
    max_len = max(int(s.shape[0]) for s in s_list)
    L = max(lane_multiple, -(-max_len // lane_multiple) * lane_multiple)
    rows = [jnp.pad(s.astype(jnp.float32), (0, L - int(s.shape[0]))) for s in s_list]
    n = len(rows)
    n_rows = -(-n // row_multiple) * row_multiple
    rows += [jnp.zeros((L,), jnp.float32)] * (n_rows - n)
    return jnp.stack(rows, axis=0)


def _reference(s_vectors, n_layers, factor):
    """Pure-JAX reference mirroring the PyTorch loop over named 'S' parameters."""
    ref = 0.0
    for s in s_vectors:
        ref = ref + jnp.sum(jnp.abs(s)) / jnp.sqrt(jnp.sum(s * s))
    return factor * ref / n_layers


if __name__ == "__main__":
    factor = 1.0

    # Case 1: synthetic "model" with 3 SVD-decomposed layers, each with an S
    # parameter (1-D vector of singular values), deterministic init.
    key = jax.random.PRNGKey(0)
    k1, k2, k3 = jax.random.split(key, 3)
    s_vectors = [
        jnp.abs(jax.random.normal(k1, (16,), dtype=jnp.float32)) + 0.1,
        jnp.abs(jax.random.normal(k2, (32,), dtype=jnp.float32)) + 0.1,
        jnp.abs(jax.random.normal(k3, (24,), dtype=jnp.float32)) + 0.1,
    ]
    s_packed = pack_s_vectors(s_vectors)                       # (8, 128)
    loss = jax.block_until_ready(hoyer_loss(s_packed, len(s_vectors), factor))
    ref = _reference(s_vectors, len(s_vectors), factor)
    assert jnp.allclose(loss, ref, rtol=1e-5, atol=1e-6), (loss, ref)

    # Case 2: more layers with awkward lengths -> exercises the multi-tile /
    # row-padding / per-tile partial-sum path (n_rows=24 -> 2 tiles of 16).
    lengths = [5, 7, 37, 64, 100, 128, 150, 200, 33, 12, 99, 77, 55, 21, 180, 66, 130, 44, 9]
    keys = jax.random.split(jax.random.PRNGKey(1), len(lengths))
    s_vectors2 = [
        jnp.abs(jax.random.normal(k, (ln,), dtype=jnp.float32)) + 0.1
        for k, ln in zip(keys, lengths)
    ]
    s_packed2 = pack_s_vectors(s_vectors2)                     # (24, 256)
    loss2 = jax.block_until_ready(hoyer_loss(s_packed2, len(s_vectors2), factor))
    ref2 = _reference(s_vectors2, len(s_vectors2), factor)
    assert jnp.allclose(loss2, ref2, rtol=1e-5, atol=1e-6), (loss2, ref2)

    print("KERNEL_OK")
</pallas_src>

<mosaic_0001>
module attributes {stable_mosaic.version = 11 : i64} {
  func.func @kernel(%arg0: i32, %arg1: memref<8x128xf32, #tpu.memory_space<vmem>>, %arg2: memref<1x1xf32, #tpu.memory_space<vmem>>) attributes {dimension_semantics = [#tpu.dimension_semantics<parallel>], iteration_bounds = array<i64: 1>, scalar_prefetch = 0 : i64, scratch_operands = 0 : i64, tpu.core_type = #tpu.core_type<tc>, window_params = [{transform_indices = @transform_0, window_bounds = array<i64: 8, 128>}, {transform_indices = @transform_1, window_bounds = array<i64: 1, 1>}]} {
    %c0 = arith.constant 0 : index
    %c0_0 = arith.constant 0 : index
    %0 = vector.load %arg1[%c0, %c0_0] : memref<8x128xf32, #tpu.memory_space<vmem>>, vector<8x128xf32>
    %1 = math.absf %0 : vector<8x128xf32>
    %2 = arith.mulf %0, %0 : vector<8x128xf32>
    %cst = arith.constant 1.000000e+00 : f32
    %3 = vector.broadcast %cst : f32 to vector<128x1xf32>
    %cst_1 = arith.constant dense<0.000000e+00> : vector<8x1xf32>
    %4 = tpu.matmul %1, %3, %cst_1 {dimension_numbers = #tpu.dot_dimension_numbers<[1], [0], [0], [1], [0, 0, 1, 1], [], []>} : vector<8x128xf32>, vector<128x1xf32>, vector<8x1xf32> -> vector<8x1xf32>
    %cst_2 = arith.constant dense<0.000000e+00> : vector<8x1xf32>
    %5 = tpu.matmul %2, %3, %cst_2 {dimension_numbers = #tpu.dot_dimension_numbers<[1], [0], [0], [1], [0, 0, 1, 1], [], []>} : vector<8x128xf32>, vector<128x1xf32>, vector<8x1xf32> -> vector<8x1xf32>
    %cst_3 = arith.constant 0.000000e+00 : f32
    %6 = vector.broadcast %cst_3 : f32 to vector<8x1xf32>
    %7 = arith.cmpf ogt, %5, %6 : vector<8x1xf32>
    %8 = math.rsqrt %5 : vector<8x1xf32>
    %9 = arith.mulf %4, %8 : vector<8x1xf32>
    %cst_4 = arith.constant 0.000000e+00 : f32
    %10 = vector.broadcast %cst_4 : f32 to vector<8x1xf32>
    %11 = arith.select %7, %9, %10 : vector<8x1xi1>, vector<8x1xf32>
    %cst_5 = arith.constant dense<0.000000e+00> : vector<1xf32>
    %12 = vector.multi_reduction <add>, %11, %cst_5 [0] : vector<8x1xf32> to vector<1xf32>
    %13 = vector.shape_cast %12 : vector<1xf32> to vector<1x1xf32>
    %c0_6 = arith.constant 0 : index
    %c0_7 = arith.constant 0 : index
    %14 = vector.load %arg2[%c0_6, %c0_7] : memref<1x1xf32, #tpu.memory_space<vmem>>, vector<1x1xf32>
    tpu.vector_store %arg2[%c0_6, %c0_7], %13 {strides = array<i32>} : memref<1x1xf32, #tpu.memory_space<vmem>>, vector<1x1xf32>,
    return
  }
  func.func @transform_0(%arg0: i32) -> (i32, i32) {
    %c0_i32 = arith.constant 0 : i32
    %c0_i32_0 = arith.constant 0 : i32
    return %arg0, %c0_i32 : i32, i32
  }
  func.func @transform_1(%arg0: i32) -> (i32, i32) {
    %c0_i32 = arith.constant 0 : i32
    %c0_i32_0 = arith.constant 0 : i32
    return %arg0, %c0_i32 : i32, i32
  }
}

</mosaic_0001>

<llo_original>
// kernel: tpu_custom_call.1
$region0: #{tpu_custom_call.1}
  #allocation0 [shape = 'u32[]', space=smem, size = 0x4, offset = 0x4, fixed_abs, tag = 'smem constant byte address 0x4 - core index']
  #allocation1 [shape = 'u32[144,128]{1,0:T(1,128)}', space=vmem, size = 0x12000, scoped, tag = 'internal scratch']
  %s0 = inlined_call_operand.hbm [shape: f32[8,128], index: 0, kind: input, shape index: {}]
  %s1 = inlined_call_operand.hbm [shape: f32[1,1], index: 1, kind: output, shape index: {}]
  %s2 = sld [smem:[#allocation0]]
  $region18: #{tpu_custom_call.1} parent=0
    _
  %s4 = ssub.s32 1, %s2
  %s5 = scalar_select 0, %s4, %s2
  $region1: #{tpu_custom_call.1} parent=0
    #allocation2 [shape = 'u8[4096]{0}', space=vmem, size = 0x1000, scoped, tag = 'input window, operand 0, single buffered']
    #allocation3 [shape = 's32[1]{0}', space=sflag, size = 0x4, scoped, tag = 'scoped memory for tpu_custom_call.1']
    #allocation4 [shape = 's32[1]{0}', space=sflag, size = 0x4, scoped, tag = 'scoped memory for tpu_custom_call.1']
    #allocation5 [shape = 'u8[512]{0}', space=vmem, size = 0x400, scoped, tag = 'output window, operand 0, single buffered']
    %6 = vsyncpa [#allocation3], 0
    %7 = vsyncpa [#allocation4], 0
    // Predicated region
    $region2: #{tpu_custom_call.1} parent=1 // pred_check
      _
    $region3: #{tpu_custom_call.1} parent=1 // pred_check_branch
      %9 = sbr.rel (0) target = $region5
    $region4: #{tpu_custom_call.1} parent=1 // pred_region
      %s11 = ssub.s32 128, 128
      %12 = vsyncadd [#allocation3], %s11
      %s14 = sshll.u32 [#allocation2], 4
      %s15 = int_to_ptr.vmem [resolvable:$true] %s14
      %17 = dma.hbm_to_vmem [thread:$0]  %s0, 128, %s15, [#allocation3]
    $region5: #{tpu_custom_call.1} parent=1 // pred_fallthru
      _
    // Predicated region
    $region6: #{tpu_custom_call.1} parent=1 // pred_check
      _
    $region7: #{tpu_custom_call.1} parent=1 // pred_check_branch
      %19 = sbr.rel (0) target = $region9
    $region8: #{tpu_custom_call.1} parent=1 // pred_region
      %20 = dma.done [#allocation3], 128
    $region9: #{tpu_custom_call.1} parent=1 // pred_fallthru
      _
    %v21 = vld [vmem:[#allocation2] sm:$0xff]
    %v22 = vand.u32 2147483647, %v21
    %v23 = vmul.f32 %v21, %v21
    %24 = vmatprep.subr.mxu0 0.0
    %25 = vmatpush1.msra.mxu0 1.0
    %26 = vmatprep.subr.mxu0 0.0
    %27 = vmatpush1.msra.mxu0 1.0
    %28 = vmatprep.subr.mxu0 0.0
    %29 = vmatpush1.msra.mxu0 1.0
    %30 = vmatprep.subr.mxu0 0.0
    %31 = vmatpush1.msra.mxu0 1.0
    %32 = vmatprep.subr.mxu0 0.0
    %33 = vmatpush1.msra.mxu0 1.0
    %34 = vmatprep.subr.mxu0 0.0
    %35 = vmatpush1.msra.mxu0 1.0
    %36 = vmatprep.subr.mxu0 0.0
    %37 = vmatpush1.msra.mxu0 1.0
    %38 = vmatprep.subr.mxu0 0.0
    %39 = vmatpush1.msra.mxu0 1.0
    %40 = vmatprep.subr.mxu0 0.0
    %41 = vmatpush1.msra.mxu0 1.0
    %42 = vmatprep.subr.mxu0 0.0
    %43 = vmatpush1.msra.mxu0 1.0
    %44 = vmatprep.subr.mxu0 0.0
    %45 = vmatpush1.msra.mxu0 1.0
    %46 = vmatprep.subr.mxu0 0.0
    %47 = vmatpush1.msra.mxu0 1.0
    %48 = vmatprep.subr.mxu0 0.0
    %49 = vmatpush1.msra.mxu0 1.0
    %50 = vmatprep.subr.mxu0 0.0
    %51 = vmatpush1.msra.mxu0 1.0
    %52 = vmatprep.subr.mxu0 0.0
    %53 = vmatpush1.msra.mxu0 1.0
    %54 = vmatprep.subr.mxu0 0.0
    %55 = vmatpush1.msra.mxu0 1.0
    %56 = vmatprep.subr.mxu0 0.0
    %57 = vmatpush1.msra.mxu0 0.0
    %58 = vmatprep.subr.mxu0 0.0
    %59 = vmatpush1.msra.mxu0 0.0
    %60 = vmatprep.subr.mxu0 0.0
    %61 = vmatpush1.msra.mxu0 0.0
    %62 = vmatprep.subr.mxu0 0.0
    %63 = vmatpush1.msra.mxu0 0.0
    %64 = vmatprep.subr.mxu0 0.0
    %65 = vmatpush1.msra.mxu0 0.0
    %66 = vmatprep.subr.mxu0 0.0
    %67 = vmatpush1.msra.mxu0 0.0
    %68 = vmatprep.subr.mxu0 0.0
    %69 = vmatpush1.msra.mxu0 0.0
    %70 = vmatprep.subr.mxu0 0.0
    %71 = vmatpush1.msra.mxu0 0.0
    %72 = vmatprep.subr.mxu0 0.0
    %73 = vmatpush1.msra.mxu0 0.0
    %74 = vmatprep.subr.mxu0 0.0
    %75 = vmatpush1.msra.mxu0 0.0
    %76 = vmatprep.subr.mxu0 0.0
    %77 = vmatpush1.msra.mxu0 0.0
    %78 = vmatprep.subr.mxu0 0.0
    %79 = vmatpush1.msra.mxu0 0.0
    %80 = vmatprep.subr.mxu0 0.0
    %81 = vmatpush1.msra.mxu0 0.0
    %82 = vmatprep.subr.mxu0 0.0
    %83 = vmatpush1.msra.mxu0 0.0
    %84 = vmatprep.subr.mxu0 0.0
    %85 = vmatpush1.msra.mxu0 0.0
    %86 = vmatprep.subr.mxu0 0.0
    %87 = vmatpush1.msra.mxu0 0.0
    %88 = vmatprep.mubr.f32.mxu0 0.0
    %89 = vmatmul.mubr.f32.gmra.mrb[0].mxu0 %v22
    %v90 = vpop.f32.mrb[0].mxu0
    %v91 = vadd.f32 0.0, %v90
    %v92 = vpop.f32.mrb[0].mxu0
    %93 = vdwg.mxu0
    %94 = vmatprep.subr.mxu0 0.0
    %95 = vmatpush1.msra.mxu0 1.0
    %96 = vmatprep.subr.mxu0 0.0
    %97 = vmatpush1.msra.mxu0 1.0
    %98 = vmatprep.subr.mxu0 0.0
    %99 = vmatpush1.msra.mxu0 1.0
    %100 = vmatprep.subr.mxu0 0.0
    %101 = vmatpush1.msra.mxu0 1.0
    %102 = vmatprep.subr.mxu0 0.0
    %103 = vmatpush1.msra.mxu0 1.0
    %104 = vmatprep.subr.mxu0 0.0
    %105 = vmatpush1.msra.mxu0 1.0
    %106 = vmatprep.subr.mxu0 0.0
    %107 = vmatpush1.msra.mxu0 1.0
    %108 = vmatprep.subr.mxu0 0.0
    %109 = vmatpush1.msra.mxu0 1.0
    %110 = vmatprep.subr.mxu0 0.0
    %111 = vmatpush1.msra.mxu0 1.0
    %112 = vmatprep.subr.mxu0 0.0
    %113 = vmatpush1.msra.mxu0 1.0
    %114 = vmatprep.subr.mxu0 0.0
    %115 = vmatpush1.msra.mxu0 1.0
    %116 = vmatprep.subr.mxu0 0.0
    %117 = vmatpush1.msra.mxu0 1.0
    %118 = vmatprep.subr.mxu0 0.0
    %119 = vmatpush1.msra.mxu0 1.0
    %120 = vmatprep.subr.mxu0 0.0
    %121 = vmatpush1.msra.mxu0 1.0
    %122 = vmatprep.subr.mxu0 0.0
    %123 = vmatpush1.msra.mxu0 1.0
    %124 = vmatprep.subr.mxu0 0.0
    %125 = vmatpush1.msra.mxu0 1.0
    %126 = vmatprep.subr.mxu0 0.0
    %127 = vmatpush1.msra.mxu0 0.0
    %128 = vmatprep.subr.mxu0 0.0
    %129 = vmatpush1.msra.mxu0 0.0
    %130 = vmatprep.subr.mxu0 0.0
    %131 = vmatpush1.msra.mxu0 0.0
    %132 = vmatprep.subr.mxu0 0.0
    %133 = vmatpush1.msra.mxu0 0.0
    %134 = vmatprep.subr.mxu0 0.0
    %135 = vmatpush1.msra.mxu0 0.0
    %136 = vmatprep.subr.mxu0 0.0
    %137 = vmatpush1.msra.mxu0 0.0
    %138 = vmatprep.subr.mxu0 0.0
    %139 = vmatpush1.msra.mxu0 0.0
    %140 = vmatprep.subr.mxu0 0.0
    %141 = vmatpush1.msra.mxu0 0.0
    %142 = vmatprep.subr.mxu0 0.0
    %143 = vmatpush1.msra.mxu0 0.0
    %144 = vmatprep.subr.mxu0 0.0
    %145 = vmatpush1.msra.mxu0 0.0
    %146 = vmatprep.subr.mxu0 0.0
    %147 = vmatpush1.msra.mxu0 0.0
    %148 = vmatprep.subr.mxu0 0.0
    %149 = vmatpush1.msra.mxu0 0.0
    %150 = vmatprep.subr.mxu0 0.0
    %151 = vmatpush1.msra.mxu0 0.0
    %152 = vmatprep.subr.mxu0 0.0
    %153 = vmatpush1.msra.mxu0 0.0
    %154 = vmatprep.subr.mxu0 0.0
    %155 = vmatpush1.msra.mxu0 0.0
    %156 = vmatprep.subr.mxu0 0.0
    %157 = vmatpush1.msra.mxu0 0.0
    %158 = vmatprep.mubr.f32.mxu0 0.0
    %159 = vmatmul.mubr.f32.gmra.mrb[0].mxu0 %v23
    %v160 = vpop.f32.mrb[0].mxu0
    %v161 = vadd.f32 0.0, %v160
    %v162 = vpop.f32.mrb[0].mxu0
    %163 = vdwg.mxu0
    %vm164 = vcmp.gt.f32.partialorder %v161, 0.0
    %v165 = vrsqrt.pop %v161
    %v166 = vmul.f32 %v91, %v165
    %v167 = vsel %vm164, %v166, 0.0
    %vm168 = vcmask 7168
    %v169 = vsel %vm168, %v167, 0.0
    %v170 = vrot.slane %v169, 4
    %v171 = vadd.f32 %v169, %v170
    %v172 = vrot.slane %v171, 2
    %v173 = vadd.f32 %v171, %v172
    %v174 = vrot.slane %v173, 1
    %v175 = vadd.f32 %v173, %v174
    %vm176 = vcmask 0
    %177 = vst.msk [vmem:[#allocation5] sm:$0x1] %vm176, %v175
    // Predicated region
    $region10: #{tpu_custom_call.1} parent=1 // pred_check
      _
    $region11: #{tpu_custom_call.1} parent=1 // pred_check_branch
      %179 = sbr.rel (0) target = $region13
    $region12: #{tpu_custom_call.1} parent=1 // pred_region
      %s181 = ssub.s32 16, 16
      %182 = vsyncadd [#allocation4], %s181
      %s184 = sshll.u32 [#allocation5], 4
      %s185 = int_to_ptr.vmem [resolvable:$true] %s184
      %187 = dma.vmem_to_hbm [thread:$0]  %s185, 16, %s1, [#allocation4]
    $region13: #{tpu_custom_call.1} parent=1 // pred_fallthru
      _
    // Predicated region
    $region14: #{tpu_custom_call.1} parent=1 // pred_check
      _
    $region15: #{tpu_custom_call.1} parent=1 // pred_check_branch
      %189 = sbr.rel (0) target = $region17
    $region16: #{tpu_custom_call.1} parent=1 // pred_region
      %190 = dma.done [#allocation4], 16
    $region17: #{tpu_custom_call.1} parent=1 // pred_fallthru
      _
    %191 = vsyncpa [#allocation3], 1
    %192 = vsyncpa [#allocation4], 1

</llo_original>
